<compile_context>
chip_gen: v7x
topology: tpu7x:2x2x1
jax: 0.10.0
libtpu: 0.0.40
codegen_flags: <defaults>
</compile_context>

<pallas_src>
import functools

import jax
import jax.numpy as jnp
from jax import lax
from jax.experimental import pallas as pl
from jax.experimental.pallas import tpu as pltpu


def _round_up(x, m):
    return (x + m - 1) // m * m


def _fit_tile(dim, requested, align):
    """Largest divisor of `dim` <= `requested` that is a multiple of `align`;
    falls back to the full extent if none exists (still legal for BlockSpec)."""
    t = min(requested, dim)
    for cand in range(t, 0, -1):
        if dim % cand == 0 and cand % align == 0:
            return cand
    return dim


def _tubelet_proj_kernel(x_ref, w_ref, b_ref, o_ref, acc_ref):
    # x_ref:  (TM, TK) bf16  im2col (patch-feature) tile
    # w_ref:  (TK, EP) bf16  projection weight tile (streams over K)
    # b_ref:  (1,  EP) f32   bias (resident across the whole grid)
    # o_ref:  (TM, EP)       output tile (resident across the K sweep)
    # acc_ref:(TM, EP) f32   accumulator scratch
    k = pl.program_id(1)

    @pl.when(k == 0)
    def _init():
        acc_ref[...] = jnp.zeros_like(acc_ref)

    acc_ref[...] += jnp.dot(x_ref[...], w_ref[...],
                            preferred_element_type=jnp.float32)

    @pl.when(k == pl.num_programs(1) - 1)
    def _epilogue():
        o_ref[...] = (acc_ref[...] + b_ref[...]).astype(o_ref.dtype)


def tubelet_embedding(x, weight, bias, patch_size, *, tm=256, tk=512):
    """Forward pass of TubeletEmbedding.

    Args:
      x:      (B, C, T, H, W) float32
      weight: (E, C, P, P, P) float32   (Conv3d weight layout)
      bias:   (E,)            float32
      patch_size: int P (kernel size == stride)
      tm, tk: target tile sizes for the M (patch) and K (feature) axes.

    Returns:
      (B, N, E) with N = (T//P) * (H//P) * (W//P), patch order (T', H', W').
    """
    B, C, T, H, W = x.shape
    E = weight.shape[0]
    P = patch_size
    assert T % P == 0 and H % P == 0 and W % P == 0, "dims must divide patch"
    Tp, Hp, Wp = T // P, H // P, W // P
    N = Tp * Hp * Wp
    K = C * P * P * P
    M = B * N

    # Lane-dense output: pad E up to a multiple of 128 (no-op for E=768 etc.).
    EP = _round_up(E, 128)

    # --- glue: tubelet gather (im2col). bf16 first -> half the HBM traffic
    # of this single XLA pass; the dim splits are free reshapes, only the
    # transpose moves data.  Feature order (c, kt, kh, kw) matches the Conv3d
    # weight layout (E, C, P, P, P).
    xb = x.astype(jnp.bfloat16)
    xp = xb.reshape(B, C, Tp, P, Hp, P, Wp, P)
    xp = xp.transpose(0, 2, 4, 6, 1, 3, 5, 7)       # (B, T', H', W', C, P, P, P)
    xp = xp.reshape(M, K)

    # Conv3d weight (E, C, P, P, P) -> (K, EP) bf16; bias -> (1, EP) f32.
    w2d = weight.astype(jnp.bfloat16).reshape(E, K).T
    b2d = bias.astype(jnp.float32).reshape(1, E)
    if EP != E:
        w2d = jnp.pad(w2d, ((0, 0), (0, EP - E)))
        b2d = jnp.pad(b2d, ((0, 0), (0, EP - E)))

    # Snap requested tiles to legal divisors: M tiles multiple of 8 (sublane),
    # K tiles multiple of 128 (lane / MXU feed).
    tm = _fit_tile(M, tm, 8)
    tk = _fit_tile(K, tk, 128)
    grid = (M // tm, K // tk)

    flops = 2 * M * K * EP
    bytes_accessed = (xp.size * 2            # im2col tile stream (bf16)
                      + w2d.size * 2 * grid[0]  # weight re-streamed per M tile
                      + M * EP * x.dtype.itemsize)

    out = pl.pallas_call(
        _tubelet_proj_kernel,
        out_shape=jax.ShapeDtypeStruct((M, EP), x.dtype),
        grid_spec=pltpu.PrefetchScalarGridSpec(
            num_scalar_prefetch=0,
            grid=grid,
            in_specs=[
                pl.BlockSpec((tm, tk), lambda i, k: (i, k)),   # xp tile
                pl.BlockSpec((tk, EP), lambda i, k: (k, 0)),   # weight (K-stream)
                pl.BlockSpec((1, EP), lambda i, k: (0, 0)),    # bias (resident)
            ],
            out_specs=pl.BlockSpec((tm, EP), lambda i, k: (i, 0)),
            scratch_shapes=[pltpu.VMEM((tm, EP), jnp.float32)],
        ),
        compiler_params=pltpu.CompilerParams(
            dimension_semantics=("parallel", "arbitrary"),
            vmem_limit_bytes=48 * 1024 * 1024,
        ),
        cost_estimate=pl.CostEstimate(
            flops=flops, transcendentals=0, bytes_accessed=bytes_accessed),
    )(xp, w2d, b2d)

    if EP != E:
        out = out[:, :E]
    return out.reshape(B, N, E)


def _reference(x, weight, bias, patch_size):
    """Pure-JAX reference (Conv3d, stride == kernel -> flatten -> transpose).

    Inputs are rounded to bf16 exactly like the kernel path, so the comparison
    differs only by f32 accumulation order."""
    xb = x.astype(jnp.bfloat16).astype(jnp.float32)
    wb = weight.astype(jnp.bfloat16).astype(jnp.float32)
    out = lax.conv_general_dilated(
        xb, wb,
        window_strides=(patch_size,) * 3,
        padding="VALID",
        dimension_numbers=("NCDHW", "OIDHW", "NCDHW"),
    )
    out = out + bias.reshape(1, -1, 1, 1, 1)
    B, E = out.shape[:2]
    return out.reshape(B, E, -1).transpose(0, 2, 1)


if __name__ == "__main__":
    # Small, Conv3d-consistent shapes:
    #   img_size=16, temporal_size=8, patch_size=4, in_chans=4, embed_dim=32
    B, C, T, Himg, Wimg = 2, 4, 8, 16, 16
    P = 4
    E = 32

    key = jax.random.PRNGKey(0)
    kx, kw, kb = jax.random.split(key, 3)
    x = jax.random.normal(kx, (B, C, T, Himg, Wimg), dtype=jnp.float32)
    weight = jax.random.normal(kw, (E, C, P, P, P), dtype=jnp.float32) * 0.02
    bias = jax.random.normal(kb, (E,), dtype=jnp.float32) * 0.02

    # Small tiles at toy sizes so both the M pipeline (grid=2) and the
    # K-accumulator/epilogue path (grid=2) actually execute; the defaults
    # (tm=256, tk=512) are sized for production ViViT shapes.
    fwd = jax.jit(functools.partial(tubelet_embedding, patch_size=P,
                                    tm=32, tk=128))
    out = fwd(x, weight, bias)
    jax.block_until_ready(out)

    ref = _reference(x, weight, bias, P)
    N = (T // P) * (Himg // P) * (Wimg // P)
    assert out.shape == (B, N, E), out.shape
    assert jnp.allclose(out, ref, atol=2e-3, rtol=2e-3), (
        float(jnp.max(jnp.abs(out - ref))))

    print("KERNEL_OK")
</pallas_src>

<mosaic_0001>
module attributes {stable_mosaic.version = 11 : i64} {
  func.func @_tubelet_proj_kernel(%arg0: i32, %arg1: i32, %arg2: memref<32x128xbf16, #tpu.memory_space<vmem>>, %arg3: memref<128x128xbf16, #tpu.memory_space<vmem>>, %arg4: memref<1x128xf32, #tpu.memory_space<vmem>>, %arg5: memref<32x128xf32, #tpu.memory_space<vmem>>, %arg6: memref<32x128xf32, #tpu.memory_space<vmem>>) attributes {dimension_semantics = [#tpu.dimension_semantics<parallel>, #tpu.dimension_semantics<arbitrary>], iteration_bounds = array<i64: 2, 2>, scalar_prefetch = 0 : i64, scratch_operands = 1 : i64, tpu.core_type = #tpu.core_type<tc>, window_params = [{transform_indices = @transform_0, window_bounds = array<i64: 32, 128>}, {transform_indices = @transform_1, window_bounds = array<i64: 128, 128>}, {pipeline_mode = #tpu.pipeline_mode<synchronous>, transform_indices = @transform_2, window_bounds = array<i64: 1, 128>}, {transform_indices = @transform_3, window_bounds = array<i64: 32, 128>}]} {
    %c0_i32 = arith.constant 0 : i32
    %0 = arith.cmpi eq, %arg1, %c0_i32 : i32
    %1 = arith.extui %0 : i1 to i32
    %c0_i32_0 = arith.constant 0 : i32
    %2 = arith.cmpi ne, %1, %c0_i32_0 : i32
    scf.if %2 {
      %cst_9 = arith.constant 0.000000e+00 : f32
      %12 = vector.broadcast %cst_9 : f32 to vector<32x128xf32>
      %c0_10 = arith.constant 0 : index
      %c0_11 = arith.constant 0 : index
      %13 = vector.load %arg6[%c0_10, %c0_11] : memref<32x128xf32, #tpu.memory_space<vmem>>, vector<32x128xf32>
      tpu.vector_store %arg6[%c0_10, %c0_11], %12 {strides = array<i32>} : memref<32x128xf32, #tpu.memory_space<vmem>>, vector<32x128xf32>,
    } else {
    }
    %c0 = arith.constant 0 : index
    %c0_1 = arith.constant 0 : index
    %3 = vector.load %arg6[%c0, %c0_1] : memref<32x128xf32, #tpu.memory_space<vmem>>, vector<32x128xf32>
    %c0_2 = arith.constant 0 : index
    %c0_3 = arith.constant 0 : index
    %4 = vector.load %arg2[%c0_2, %c0_3] : memref<32x128xbf16, #tpu.memory_space<vmem>>, vector<32x128xbf16>
    %c0_4 = arith.constant 0 : index
    %c0_5 = arith.constant 0 : index
    %5 = vector.load %arg3[%c0_4, %c0_5] : memref<128x128xbf16, #tpu.memory_space<vmem>>, vector<128x128xbf16>
    %cst = arith.constant dense<0.000000e+00> : vector<32x128xf32>
    %6 = tpu.matmul %4, %5, %cst {dimension_numbers = #tpu.dot_dimension_numbers<[1], [0], [0], [1], [0, 0, 1, 1], [], []>} : vector<32x128xbf16>, vector<128x128xbf16>, vector<32x128xf32> -> vector<32x128xf32>
    %7 = arith.addf %3, %6 : vector<32x128xf32>
    %c0_6 = arith.constant 0 : index
    %c0_7 = arith.constant 0 : index
    %8 = vector.load %arg6[%c0_6, %c0_7] : memref<32x128xf32, #tpu.memory_space<vmem>>, vector<32x128xf32>
    tpu.vector_store %arg6[%c0_6, %c0_7], %7 {strides = array<i32>} : memref<32x128xf32, #tpu.memory_space<vmem>>, vector<32x128xf32>,
    %c1_i32 = arith.constant 1 : i32
    %9 = arith.cmpi eq, %arg1, %c1_i32 : i32
    %10 = arith.extui %9 : i1 to i32
    %c0_i32_8 = arith.constant 0 : i32
    %11 = arith.cmpi ne, %10, %c0_i32_8 : i32
    scf.if %11 {
      %c0_9 = arith.constant 0 : index
      %c0_10 = arith.constant 0 : index
      %12 = vector.load %arg6[%c0_9, %c0_10] : memref<32x128xf32, #tpu.memory_space<vmem>>, vector<32x128xf32>
      %c0_11 = arith.constant 0 : index
      %c0_12 = arith.constant 0 : index
      %13 = vector.load %arg4[%c0_11, %c0_12] : memref<1x128xf32, #tpu.memory_space<vmem>>, vector<1x128xf32>
      %14 = vector.broadcast %13 : vector<1x128xf32> to vector<32x128xf32>
      %15 = arith.addf %12, %14 : vector<32x128xf32>
      %c0_13 = arith.constant 0 : index
      %c0_14 = arith.constant 0 : index
      %16 = vector.load %arg5[%c0_13, %c0_14] : memref<32x128xf32, #tpu.memory_space<vmem>>, vector<32x128xf32>
      tpu.vector_store %arg5[%c0_13, %c0_14], %15 {strides = array<i32>} : memref<32x128xf32, #tpu.memory_space<vmem>>, vector<32x128xf32>,
    } else {
    }
    return
  }
  func.func @transform_0(%arg0: i32, %arg1: i32) -> (i32, i32) {
    %c0_i32 = arith.constant 0 : i32
    return %arg0, %arg1 : i32, i32
  }
  func.func @transform_1(%arg0: i32, %arg1: i32) -> (i32, i32) {
    %c0_i32 = arith.constant 0 : i32
    %c0_i32_0 = arith.constant 0 : i32
    return %arg1, %c0_i32 : i32, i32
  }
  func.func @transform_2(%arg0: i32, %arg1: i32) -> (i32, i32) {
    %c0_i32 = arith.constant 0 : i32
    %c0_i32_0 = arith.constant 0 : i32
    %c0_i32_1 = arith.constant 0 : i32
    return %c0_i32, %c0_i32_0 : i32, i32
  }
  func.func @transform_3(%arg0: i32, %arg1: i32) -> (i32, i32) {
    %c0_i32 = arith.constant 0 : i32
    %c0_i32_0 = arith.constant 0 : i32
    return %arg0, %c0_i32 : i32, i32
  }
}

</mosaic_0001>

<llo_original>
// kernel: tubelet_embedding.1
$region0: #{tubelet_embedding.1}
  #allocation0 [shape = 'u32[]', space=smem, size = 0x4, offset = 0x4, fixed_abs, tag = 'smem constant byte address 0x4 - core index']
  #allocation1 [shape = 'u32[144,128]{1,0:T(1,128)}', space=vmem, size = 0x12000, scoped, tag = 'internal scratch']
  #allocation2 [shape = 'f32[32,128]{1,0:T(8,128)}', space=vmem, size = 0x4000, scoped, tag = 'scratch operand']
  %s0 = inlined_call_operand.vmem [shape: bf16[64,256], index: 0, kind: input, shape index: {}]
  %s1 = inlined_call_operand.vmem [shape: bf16[256,128], index: 1, kind: input, shape index: {}]
  %s2 = inlined_call_operand.vmem [shape: f32[1,128], index: 2, kind: input, shape index: {}]
  %s3 = inlined_call_operand.hbm [shape: f32[64,128], index: 3, kind: output, shape index: {}]
  %s4 = sld [smem:[#allocation0]]
  $region94: #{tubelet_embedding.1} parent=0
    _
  %s6 = ssub.s32 1, %s4
  %s7 = scalar_select 0, %s6, %s4
  $region1: #{tubelet_embedding.1} parent=0
    #allocation3 [shape = 'u8[16384]{0}', space=vmem, size = 0x4000, scoped, tag = 'input window, operand 0']
    #allocation4 [shape = 'u8[32768]{0}', space=vmem, size = 0x8000, scoped, tag = 'output window, operand 0']
    #allocation5 [shape = 's32[2]{0}', space=sflag, size = 0x8, scoped, tag = 'scoped memory for tubelet_embedding.1']
    %8 = vsyncpa [#allocation5], 0
    %s9 = scalar_lea.sflag [#allocation5], 1
    %10 = vsyncpa %s9, 0
    loop: start=0, step=1, limit=6
    $region2: #{tubelet_embedding.1} parent=1 // loop_pre_header
      _
    $region3: #{tubelet_embedding.1} parent=1 // loop_header
      %s12 = sphi 0, %s16
      %p13 = scmp.ge.s32.totalorder %s12, 6
      %s19 = sphi 0, %s31
      %s20 = sphi 0, %s27
      %s21 = sphi 0, %s19
      %s22 = sphi 0, %s20
      %s23 = sphi 0, %s21
      %s24 = sphi 0, %s22
      %s36 = sphi 0, %s38
      %s39 = sphi 0, %s36
      %s40 = sphi 0, %s39
      %s56 = sphi 0, %s40
      %s62 = sphi 0, %s64
      %s65 = sphi 0, %s62
      %s66 = sphi 0, %s65
      %s82 = sphi 0, %s66
      %s86 = sphi 0, %s86
      %s88 = sphi 0, %s86
      %s89 = sphi 0, %s88
      %s103 = sphi 0, %s89
      %s109 = sphi 0, %s111
      %s112 = sphi 0, %s109
      %s113 = sphi 0, %s112
      %s129 = sphi 0, %s113
    $region4: #{tubelet_embedding.1} parent=1 // loop_header_branch
      %15 = sbr.rel (%p13) target = $region8
    $region5: #{tubelet_embedding.1} parent=1 // loop_body
      %s17 = ssub.s32 %s12, 1
      %s18 = ssub.s32 %s12, 2
      %s25 = sadd.s32 1, %s20
      %p26 = scmp.ge.s32.totalorder %s25, 2
      %s27 = scalar_select %p26, 0, %s25
      %s28 = sadd.s32 1, %s19
      %s29 = scalar_select %p26, %s28, %s19
      %p30 = scmp.ge.s32.totalorder %s29, 2
      %s31 = scalar_select %p30, 0, %s29
      %s32 = ssub.s32 %s19, %s31
      %s33 = ssub.s32 %s20, %s27
      %s34 = sor.u32 %s32, %s33
      %p35 = scmp.eq.s32.totalorder %s34, 0
      %s37 = sadd.s32 %s36, 1
      %s38 = scalar_select %p35, %s36, %s37
      %p41 = pneg %p35
      %p42 = scmp.eq.s32.totalorder %s12, 3
      %p43 = por %p41, %p42
      %p44 = scmp.ne.s32.totalorder %s36, %s39
      %p45 = scmp.eq.s32.totalorder %s12, 0
      %p46 = por %p44, %p45
      %p47 = scmp.ne.s32.totalorder %s36, %s39
      %p48 = scmp.eq.s32.totalorder %s17, 3
      %p49 = por %p47, %p48
      %p50 = scmp.ne.s32.totalorder %s39, %s40
      %p51 = scmp.eq.s32.totalorder %s17, 0
      %p52 = por %p50, %p51
      %p53 = scmp.ne.s32.totalorder %s39, %s40
      %p54 = scmp.eq.s32.totalorder %s18, 3
      %p55 = por %p53, %p54
      %p57 = scmp.ne.s32.totalorder %s40, %s56
      %p58 = scmp.eq.s32.totalorder %s18, 0
      %p59 = por %p57, %p58
      %s60 = ssub.s32 %s20, %s27
      %p61 = scmp.eq.s32.totalorder %s60, 0
      %s63 = sadd.s32 %s62, 1
      %s64 = scalar_select %p61, %s62, %s63
      %p67 = pneg %p61
      %p68 = scmp.eq.s32.totalorder %s12, 3
      %p69 = por %p67, %p68
      %p70 = scmp.ne.s32.totalorder %s62, %s65
      %p71 = scmp.eq.s32.totalorder %s12, 0
      %p72 = por %p70, %p71
      %p73 = scmp.ne.s32.totalorder %s62, %s65
      %p74 = scmp.eq.s32.totalorder %s17, 3
      %p75 = por %p73, %p74
      %p76 = scmp.ne.s32.totalorder %s65, %s66
      %p77 = scmp.eq.s32.totalorder %s17, 0
      %p78 = por %p76, %p77
      %p79 = scmp.ne.s32.totalorder %s65, %s66
      %p80 = scmp.eq.s32.totalorder %s18, 3
      %p81 = por %p79, %p80
      %p83 = scmp.ne.s32.totalorder %s66, %s82
      %p84 = scmp.eq.s32.totalorder %s18, 0
      %p85 = por %p83, %p84
      %s87 = sadd.s32 %s86, 1
      %p90 = scmp.eq.s32.totalorder %s12, 3
      %p91 = scmp.ne.s32.totalorder %s86, %s88
      %p92 = scmp.eq.s32.totalorder %s12, 0
      %p93 = por %p91, %p92
      %p94 = scmp.ne.s32.totalorder %s86, %s88
      %p95 = scmp.eq.s32.totalorder %s17, 3
      %p96 = por %p94, %p95
      %p97 = scmp.ne.s32.totalorder %s88, %s89
      %p98 = scmp.eq.s32.totalorder %s17, 0
      %p99 = por %p97, %p98
      %p100 = scmp.ne.s32.totalorder %s88, %s89
      %p101 = scmp.eq.s32.totalorder %s18, 3
      %p102 = por %p100, %p101
      %p104 = scmp.ne.s32.totalorder %s89, %s103
      %p105 = scmp.eq.s32.totalorder %s18, 0
      %p106 = por %p104, %p105
      %s107 = ssub.s32 %s19, %s31
      %p108 = scmp.eq.s32.totalorder %s107, 0
      %s110 = sadd.s32 %s109, 1
      %s111 = scalar_select %p108, %s109, %s110
      %p114 = pneg %p108
      %p115 = scmp.eq.s32.totalorder %s12, 3
      %p116 = por %p114, %p115
      %p117 = scmp.ne.s32.totalorder %s109, %s112
      %p118 = scmp.eq.s32.totalorder %s12, 0
      %p119 = por %p117, %p118
      %p120 = scmp.ne.s32.totalorder %s109, %s112
      %p121 = scmp.eq.s32.totalorder %s17, 3
      %p122 = por %p120, %p121
      %p123 = scmp.ne.s32.totalorder %s112, %s113
      %p124 = scmp.eq.s32.totalorder %s17, 0
      %p125 = por %p123, %p124
      %p126 = scmp.ne.s32.totalorder %s112, %s113
      %p127 = scmp.eq.s32.totalorder %s18, 3
      %p128 = por %p126, %p127
      %p130 = scmp.ne.s32.totalorder %s113, %s129
      %p131 = scmp.eq.s32.totalorder %s18, 0
      %p132 = por %p130, %p131
      %p133 = scmp.le.s32.totalorder 1, %s12
      %p134 = scmp.lt.s32.totalorder %s12, 5
      %p135 = pnand %p133, %p134
      %p136 = pneg %p135
      // Predicated region
      $region9: #{tubelet_embedding.1} parent=5 // pred_check
        _
      $region10: #{tubelet_embedding.1} parent=5 // pred_check_branch
        %138 = sbr.rel (%p135) target = $region12
      $region11: #{tubelet_embedding.1} parent=5 // pred_region
        %s139 = ssub.s32 %s12, 1
        // Predicated region
        $region13: #{tubelet_embedding.1} parent=11 // pred_check
          %p140 = pneg %p99
        $region14: #{tubelet_embedding.1} parent=11 // pred_check_branch
          %142 = sbr.rel (%p140) target = $region16
        $region15: #{tubelet_embedding.1} parent=11 // pred_region
          _
        $region16: #{tubelet_embedding.1} parent=11 // pred_fallthru
          _
      $region12: #{tubelet_embedding.1} parent=5 // pred_fallthru
        _
      %p143 = scmp.lt.s32.totalorder %s12, 4
      // Predicated region
      $region17: #{tubelet_embedding.1} parent=5 // pred_check
        %p144 = pneg %p143
      $region18: #{tubelet_embedding.1} parent=5 // pred_check_branch
        %146 = sbr.rel (%p144) target = $region20
      $region19: #{tubelet_embedding.1} parent=5 // pred_region
        // Predicated region
        $region21: #{tubelet_embedding.1} parent=19 // pred_check
          %p147 = pneg %p46
        $region22: #{tubelet_embedding.1} parent=19 // pred_check_branch
          %149 = sbr.rel (%p147) target = $region24
        $region23: #{tubelet_embedding.1} parent=19 // pred_region
          %s150 = sand.u32 %s36, 1
          %s151 = sand.u32 %s36, 1
          %s152 = smul.addr %s151, 16
          %s153 = scalar_lea.vmem [#allocation3], %s152
          %s154 = smul.u32 4, %s19
          %s155 = smul.addr %s154, 2
          %s156 = sadd.s32 %s20, %s155
          %s157 = smul.addr %s156, 4
          %s158 = scalar_lea.vmem %s0, %s157
          // Predicated region
          $region25: #{tubelet_embedding.1} parent=23 // pred_check
            _
          $region26: #{tubelet_embedding.1} parent=23 // pred_check_branch
            %160 = sbr.rel (0) target = $region28
          $region27: #{tubelet_embedding.1} parent=23 // pred_region
            // Predicated region
            $region29: #{tubelet_embedding.1} parent=27 // pred_check
              _
            $region30: #{tubelet_embedding.1} parent=27 // pred_check_branch
              %162 = sbr.rel target = $region32
            $region31: #{tubelet_embedding.1} parent=27 // pred_region
              // Predicated region
              $region44: #{tubelet_embedding.1} parent=31 // pred_check
                _
              $region45: #{tubelet_embedding.1} parent=31 // pred_check_branch
                %183 = sbr.rel (0) target = $region47
              $region46: #{tubelet_embedding.1} parent=31 // pred_region
                loop: start=0, step=1, limit=1
                $region48: #{tubelet_embedding.1} parent=46 // loop_pre_header
                  _
                $region49: #{tubelet_embedding.1} parent=46 // loop_header
                  %s185 = sphi 0, %s189
                  %p186 = scmp.ge.s32.totalorder %s185, 1
                  %s190 = sphi %s158, %s158
                  %s191 = sphi %s153, %s153
                $region50: #{tubelet_embedding.1} parent=46 // loop_header_branch
                  %188 = sbr.rel (%p186) target = $region54
                $region51: #{tubelet_embedding.1} parent=46 // loop_body
                  _
                $region52: #{tubelet_embedding.1} parent=46 // loop_footer
                  %s189 = sadd.s32 1, %s185
                $region53: #{tubelet_embedding.1} parent=46 // loop_footer_branch
                  %184 = sbr.rel target = $region49
                $region54: #{tubelet_embedding.1} parent=46 // loop_exit
                  _
                loop: start=0, step=1, limit=1
                $region55: #{tubelet_embedding.1} parent=46 // loop_pre_header
                  _
                $region56: #{tubelet_embedding.1} parent=46 // loop_header
                  %s194 = sphi 0, %s198
                  %p195 = scmp.ge.s32.totalorder %s194, 1
                  %s199 = sphi %s158, %s158
                  %s200 = sphi %s153, %s153
                $region57: #{tubelet_embedding.1} parent=46 // loop_header_branch
                  %197 = sbr.rel (%p195) target = $region61
                $region58: #{tubelet_embedding.1} parent=46 // loop_body
                  %v201 = vld [vmem:[%s199] sm:$0xf]
                  %202 = vst [vmem:[%s200] sm:$0xf] %v201
                  %v203 = vld [vmem:[%s199 + $0x8] sm:$0xf]
                  %204 = vst [vmem:[%s200 + $0x4] sm:$0xf] %v203
                  %v205 = vld [vmem:[%s199 + $0x10] sm:$0xf]
                  %206 = vst [vmem:[%s200 + $0x8] sm:$0xf] %v205
                  %v207 = vld [vmem:[%s199 + $0x18] sm:$0xf]
                  %208 = vst [vmem:[%s200 + $0xc] sm:$0xf] %v207
                $region59: #{tubelet_embedding.1} parent=46 // loop_footer
                  %s198 = sadd.s32 1, %s194
                $region60: #{tubelet_embedding.1} parent=46 // loop_footer_branch
                  %193 = sbr.rel target = $region56
                $region61: #{tubelet_embedding.1} parent=46 // loop_exit
                  _
              $region47: #{tubelet_embedding.1} parent=31 // pred_fallthru
                _
            $region32: #{tubelet_embedding.1} parent=27 // pred_fallthru
              _
            // Predicated region
            $region33: #{tubelet_embedding.1} parent=27 // pred_check
              _
            $region34: #{tubelet_embedding.1} parent=27 // pred_check_branch
              %164 = sbr.rel (0) target = $region36
            $region35: #{tubelet_embedding.1} parent=27 // pred_region
              loop: start=0, step=1, limit=1
              $region37: #{tubelet_embedding.1} parent=35 // loop_pre_header
                _
              $region38: #{tubelet_embedding.1} parent=35 // loop_header
                %s167 = sphi 0, %s171
                %p168 = scmp.ge.s32.totalorder %s167, 1
                %s172 = sphi %s158, %s158
                %s173 = sphi %s153, %s153
              $region39: #{tubelet_embedding.1} parent=35 // loop_header_branch
                %170 = sbr.rel (%p168) target = $region43
              $region40: #{tubelet_embedding.1} parent=35 // loop_body
                %v174 = vld [vmem:[%s172] sm:$0xf]
                %175 = vst [vmem:[%s173] sm:$0xf] %v174
                %v176 = vld [vmem:[%s172 + $0x8] sm:$0xf]
                %177 = vst [vmem:[%s173 + $0x4] sm:$0xf] %v176
                %v178 = vld [vmem:[%s172 + $0x10] sm:$0xf]
                %179 = vst [vmem:[%s173 + $0x8] sm:$0xf] %v178
                %v180 = vld [vmem:[%s172 + $0x18] sm:$0xf]
                %181 = vst [vmem:[%s173 + $0xc] sm:$0xf] %v180
              $region41: #{tubelet_embedding.1} parent=35 // loop_footer
                %s171 = sadd.s32 1, %s167
              $region42: #{tubelet_embedding.1} parent=35 // loop_footer_branch
                %166 = sbr.rel target = $region38
              $region43: #{tubelet_embedding.1} parent=35 // loop_exit
                _
            $region36: #{tubelet_embedding.1} parent=27 // pred_fallthru
              _
          $region28: #{tubelet_embedding.1} parent=23 // pred_fallthru
            _
          %209 = vnop
        $region24: #{tubelet_embedding.1} parent=19 // pred_fallthru
          _
        // Predicated region
        $region62: #{tubelet_embedding.1} parent=19 // pred_check
          %p210 = pneg %p72
        $region63: #{tubelet_embedding.1} parent=19 // pred_check_branch
          %212 = sbr.rel (%p210) target = $region65
        $region64: #{tubelet_embedding.1} parent=19 // pred_region
          %s213 = smul.u32 16, %s20
          %p214 = scmp.lt.s32.totalorder %s213, 31
          %s215 = scalar_select %p214, %s213, 31
          %s216 = smul.addr %s215, 4
          %s217 = scalar_lea.vmem %s1, %s216
          %s218 = smul.u32 16, %s20
        $region65: #{tubelet_embedding.1} parent=19 // pred_fallthru
          _
      $region20: #{tubelet_embedding.1} parent=5 // pred_fallthru
        _
      %p219 = scmp.le.s32.totalorder 1, %s12
      %p220 = scmp.lt.s32.totalorder %s12, 5
      %p221 = pnand %p219, %p220
      %p222 = pneg %p221
      // Predicated region
      $region66: #{tubelet_embedding.1} parent=5 // pred_check
        _
      $region67: #{tubelet_embedding.1} parent=5 // pred_check_branch
        %224 = sbr.rel (%p221) target = $region69
      $region68: #{tubelet_embedding.1} parent=5 // pred_region
        %s225 = ssub.s32 %s12, 1
        %s226 = sand.u32 %s39, 1
        %s227 = sand.u32 %s39, 1
        %s228 = smul.addr %s227, 16
        %s229 = scalar_lea.vmem [#allocation3], %s228
        // Predicated region
        $region70: #{tubelet_embedding.1} parent=68 // pred_check
          %p230 = pneg %p52
        $region71: #{tubelet_embedding.1} parent=68 // pred_check_branch
          %232 = sbr.rel (%p230) target = $region73
        $region72: #{tubelet_embedding.1} parent=68 // pred_region
          _
        $region73: #{tubelet_embedding.1} parent=68 // pred_fallthru
          _
        %s233 = sand.u32 %s39, 1
        %s234 = sand.u32 %s39, 1
        %s235 = smul.addr %s234, 16
        %s236 = scalar_lea.vmem [#allocation3], %s235
        %p237 = pneg %p52
        %p238 = pneg %p49
        %s239 = smul.u32 16, %s22
        %p240 = scmp.lt.s32.totalorder %s239, 31
        %s241 = scalar_select %p240, %s239, 31
        %s242 = smul.addr %s241, 4
        %s243 = scalar_lea.vmem %s1, %s242
        %p244 = pneg %p78
        %p245 = pneg %p75
        %p246 = pneg %p99
        %p247 = pneg %p96
        %p248 = pneg %p125
        %p249 = pneg %p122
        %s250 = sand.u32 %s112, 1
        %s251 = scalar_lea.sflag [#allocation5], %s250
        %s252 = sand.u32 %s112, 1
        %s253 = smul.addr %s252, 32
        %s254 = scalar_lea.vmem [#allocation4], %s253
        %s255 = smul.u32 4, %s21
        %s256 = smul.u32 16, %s22
        %p257 = scmp.lt.s32.totalorder %s256, 31
        %s258 = scalar_select %p257, %s256, 31
        %s259 = smul.addr %s258, 4
        %s260 = scalar_lea.vmem %s1, %s259
        %s261 = smul.u32 16, %s22
        %s262 = smul.u32 4, %s21
        %p264 = scmp.eq.s32.totalorder %s22, 0
        // Predicated region
        $region74: #{tubelet_embedding.1} parent=68 // pred_check
          %p265 = pneg %p264
        $region75: #{tubelet_embedding.1} parent=68 // pred_check_branch
          %267 = sbr.rel (%p265) target = $region77
        $region76: #{tubelet_embedding.1} parent=68 // pred_region
          %268 = vst [vmem:[#allocation2] sm:$0xff] 0.0
          %269 = vst [vmem:[#allocation2 + $0x8] sm:$0xff] 0.0
          %270 = vst [vmem:[#allocation2 + $0x10] sm:$0xff] 0.0
          %271 = vst [vmem:[#allocation2 + $0x18] sm:$0xff] 0.0
        $region77: #{tubelet_embedding.1} parent=68 // pred_fallthru
          _
        %v272 = vld [vmem:[#allocation2] sm:$0xff]
        %v273 = vld [vmem:[#allocation2 + $0x8] sm:$0xff]
        %v274 = vld [vmem:[#allocation2 + $0x10] sm:$0xff]
        %v275 = vld [vmem:[#allocation2 + $0x18] sm:$0xff]
        %v276 = vld [vmem:[%s229] sm:$0xf]
        %v277 = vld [vmem:[%s229 + $0x4] sm:$0xf]
        %v278 = vld [vmem:[%s229 + $0x8] sm:$0xf]
        %v279 = vld [vmem:[%s229 + $0xc] sm:$0xf]
        %v280 = vld [vmem:[%s260] sm:$0xf]
        %v281 = vld [vmem:[%s260 + $0x4] sm:$0xf]
        %v282 = vld [vmem:[%s260 + $0x8] sm:$0xf]
        %v283 = vld [vmem:[%s260 + $0xc] sm:$0xf]
        %v284 = vld [vmem:[%s260 + $0x10] sm:$0xf]
        %v285 = vld [vmem:[%s260 + $0x14] sm:$0xf]
        %v286 = vld [vmem:[%s260 + $0x18] sm:$0xf]
        %v287 = vld [vmem:[%s260 + $0x1c] sm:$0xf]
        %v288 = vld [vmem:[%s260 + $0x20] sm:$0xf]
        %v289 = vld [vmem:[%s260 + $0x24] sm:$0xf]
        %v290 = vld [vmem:[%s260 + $0x28] sm:$0xf]
        %v291 = vld [vmem:[%s260 + $0x2c] sm:$0xf]
        %v292 = vld [vmem:[%s260 + $0x30] sm:$0xf]
        %v293 = vld [vmem:[%s260 + $0x34] sm:$0xf]
        %v294 = vld [vmem:[%s260 + $0x38] sm:$0xf]
        %v295 = vld [vmem:[%s260 + $0x3c] sm:$0xf]
        %v300 = vunpack.c.l.b16 %v276
        %v301 = vunpack.c.l.b16 %v277
        %v302 = vunpack.c.l.b16 %v278
        %v303 = vunpack.c.l.b16 %v279
        %v304 = vpack.c.b16 %v301, %v300
        %v305 = vpack.c.b16 %v303, %v302
        %v324 = vunpack.c.l.b16 %v280
        %v325 = vunpack.c.l.b16 %v281
        %v326 = vunpack.c.l.b16 %v282
        %v327 = vunpack.c.l.b16 %v283
        %v328 = vunpack.c.l.b16 %v284
        %v329 = vunpack.c.l.b16 %v285
        %v330 = vunpack.c.l.b16 %v286
        %v331 = vunpack.c.l.b16 %v287
        %v332 = vunpack.c.l.b16 %v288
        %v333 = vunpack.c.l.b16 %v289
        %v334 = vunpack.c.l.b16 %v290
        %v335 = vunpack.c.l.b16 %v291
        %v336 = vunpack.c.l.b16 %v292
        %v337 = vunpack.c.l.b16 %v293
        %v338 = vunpack.c.l.b16 %v294
        %v339 = vunpack.c.l.b16 %v295
        %v340 = vpack.c.b16 %v325, %v324
        %v341 = vpack.c.b16 %v327, %v326
        %v342 = vpack.c.b16 %v329, %v328
        %v343 = vpack.c.b16 %v331, %v330
        %v344 = vpack.c.b16 %v333, %v332
        %v345 = vpack.c.b16 %v335, %v334
        %v346 = vpack.c.b16 %v337, %v336
        %v347 = vpack.c.b16 %v339, %v338
        %356 = vmatprep.subr.bf16.mxu0 0
        %357 = vmatpush1.bf16.msra.mxu0 %v340
        %358 = vmatprep.subr.bf16.mxu0 0
        %359 = vmatpush1.bf16.msra.mxu0 %v341
        %360 = vmatprep.subr.bf16.mxu0 0
        %361 = vmatpush1.bf16.msra.mxu0 %v342
        %362 = vmatprep.subr.bf16.mxu0 0
        %363 = vmatpush1.bf16.msra.mxu0 %v343
        %364 = vmatprep.subr.bf16.mxu0 0
        %365 = vmatpush1.bf16.msra.mxu0 %v344
        %366 = vmatprep.subr.bf16.mxu0 0
        %367 = vmatpush1.bf16.msra.mxu0 %v345
        %368 = vmatprep.subr.bf16.mxu0 0
        %369 = vmatpush1.bf16.msra.mxu0 %v346
        %370 = vmatprep.subr.bf16.mxu0 0
        %371 = vmatpush1.bf16.msra.mxu0 %v347
        %372 = vmatprep.subr.bf16.mxu0 0
        %373 = vmatpush1.bf16.msra.mxu0 0
        %374 = vmatprep.subr.bf16.mxu0 0
        %375 = vmatpush1.bf16.msra.mxu0 0
        %376 = vmatprep.subr.bf16.mxu0 0
        %377 = vmatpush1.bf16.msra.mxu0 0
        %378 = vmatprep.subr.bf16.mxu0 0
        %379 = vmatpush1.bf16.msra.mxu0 0
        %380 = vmatprep.subr.bf16.mxu0 0
        %381 = vmatpush1.bf16.msra.mxu0 0
        %382 = vmatprep.subr.bf16.mxu0 0
        %383 = vmatpush1.bf16.msra.mxu0 0
        %384 = vmatprep.subr.bf16.mxu0 0
        %385 = vmatpush1.bf16.msra.mxu0 0
        %386 = vmatprep.subr.bf16.mxu0 0
        %387 = vmatpush1.bf16.msra.mxu0 0
        %388 = vmatprep.mubr.bf16.mxu0 0
        %389 = vmatmul.mubr.bf16.gmra.mrb[0].mxu0 %v304
        %v390 = vpop.f32.mrb[0].mxu0
        %v391 = vadd.f32 0.0, %v390
        %v392 = vpop.f32.mrb[0].mxu0
        %v393 = vpop.f32.mrb[0].mxu0
        %v394 = vadd.f32 0.0, %v393
        %v395 = vpop.f32.mrb[0].mxu0
        %396 = vmatprep.mubr.bf16.mxu0 0
        %397 = vmatmul.mubr.bf16.gmra.mrb[0].mxu0 %v305
        %v398 = vpop.f32.mrb[0].mxu0
        %v399 = vadd.f32 0.0, %v398
        %v400 = vpop.f32.mrb[0].mxu0
        %v401 = vpop.f32.mrb[0].mxu0
        %v402 = vadd.f32 0.0, %v401
        %v403 = vpop.f32.mrb[0].mxu0
        %404 = vdwg.mxu0
        %v405 = vadd.f32 %v272, %v391
        %v406 = vadd.f32 %v273, %v394
        %v407 = vadd.f32 %v274, %v399
        %v408 = vadd.f32 %v275, %v402
        %409 = vst [vmem:[#allocation2] sm:$0xff] %v405
        %410 = vst [vmem:[#allocation2 + $0x8] sm:$0xff] %v406
        %411 = vst [vmem:[#allocation2 + $0x10] sm:$0xff] %v407
        %412 = vst [vmem:[#allocation2 + $0x18] sm:$0xff] %v408
        %p413 = scmp.eq.s32.totalorder %s22, 1
        // Predicated region
        $region78: #{tubelet_embedding.1} parent=68 // pred_check
          %p414 = pneg %p413
        $region79: #{tubelet_embedding.1} parent=68 // pred_check_branch
          %416 = sbr.rel (%p414) target = $region81
        $region80: #{tubelet_embedding.1} parent=68 // pred_region
          %v417 = vld [vmem:[#allocation2] sm:$0xff]
          %v418 = vld [vmem:[#allocation2 + $0x8] sm:$0xff]
          %v419 = vld [vmem:[#allocation2 + $0x10] sm:$0xff]
          %v420 = vld [vmem:[#allocation2 + $0x18] sm:$0xff]
          %v421 = vld [vmem:[%s2] sm:$0x1]
          %v423 = vlaneseq
          %v424 = vshrl.u32 %v423, 7
          %v425 = vsub.s32 0, %v424
          %v426 = vrot.slane %v421, %v425
          %v428 = vadd.f32 %v417, %v426
          %v429 = vadd.f32 %v418, %v426
          %v430 = vadd.f32 %v419, %v426
          %v431 = vadd.f32 %v420, %v426
          %432 = vst [vmem:[%s254] sm:$0xff] %v428
          %433 = vst [vmem:[%s254 + $0x8] sm:$0xff] %v429
          %434 = vst [vmem:[%s254 + $0x10] sm:$0xff] %v430
          %435 = vst [vmem:[%s254 + $0x18] sm:$0xff] %v431
        $region81: #{tubelet_embedding.1} parent=68 // pred_fallthru
          _
        %s436 = sand.u32 %s112, 1
        %s437 = scalar_lea.sflag [#allocation5], %s436
        %s438 = sand.u32 %s112, 1
        %s439 = smul.addr %s438, 32
        %s440 = scalar_lea.vmem [#allocation4], %s439
        // Predicated region
        $region82: #{tubelet_embedding.1} parent=68 // pred_check
          %p441 = pneg %p122
        $region83: #{tubelet_embedding.1} parent=68 // pred_check_branch
          %443 = sbr.rel (%p441) target = $region85
        $region84: #{tubelet_embedding.1} parent=68 // pred_region
          %s444 = smul.u32 4, %s21
          %s446 = ssub.s32 512, 512
          %447 = vsyncadd %s437, %s446
          %s448 = smul.addr %s444, 128
          %s449 = scalar_lea.hbm %s3, %s448
          %s450 = sshll.u32 %s440, 4
          %s451 = int_to_ptr.vmem [resolvable:$true] %s450
          %456 = dma.vmem_to_hbm [thread:$0]  %s451, 512, %s449, %s437, 128, 128, 8
        $region85: #{tubelet_embedding.1} parent=68 // pred_fallthru
          _
      $region69: #{tubelet_embedding.1} parent=5 // pred_fallthru
        _
      %p457 = scmp.le.s32.totalorder 2, %s12
      // Predicated region
      $region86: #{tubelet_embedding.1} parent=5 // pred_check
        %p458 = pneg %p457
      $region87: #{tubelet_embedding.1} parent=5 // pred_check_branch
        %460 = sbr.rel (%p458) target = $region89
      $region88: #{tubelet_embedding.1} parent=5 // pred_region
        %s461 = ssub.s32 %s12, 2
        // Predicated region
        $region90: #{tubelet_embedding.1} parent=88 // pred_check
          %p462 = pneg %p128
        $region91: #{tubelet_embedding.1} parent=88 // pred_check_branch
          %464 = sbr.rel (%p462) target = $region93
        $region92: #{tubelet_embedding.1} parent=88 // pred_region
          %s465 = sand.u32 %s113, 1
          %s466 = scalar_lea.sflag [#allocation5], %s465
          %s467 = sand.u32 %s113, 1
          %s468 = smul.addr %s467, 32
          %s469 = scalar_lea.vmem [#allocation4], %s468
          %470 = dma.done %s466, 512
        $region93: #{tubelet_embedding.1} parent=88 // pred_fallthru
          _
      $region89: #{tubelet_embedding.1} parent=5 // pred_fallthru
        _
    $region6: #{tubelet_embedding.1} parent=1 // loop_footer
      %s16 = sadd.s32 1, %s12
    $region7: #{tubelet_embedding.1} parent=1 // loop_footer_branch
      %11 = sbr.rel target = $region3
    $region8: #{tubelet_embedding.1} parent=1 // loop_exit
      _
    %471 = vsyncpa [#allocation5], 1
    %s472 = scalar_lea.sflag [#allocation5], 1
    %473 = vsyncpa %s472, 1

</llo_original>
